<compile_context>
chip_gen: v5e
topology: v5e:2x2
jax: 0.10.0
libtpu: 0.0.40
codegen_flags: <defaults>
</compile_context>

<pallas_src>
import functools

import jax
import jax.numpy as jnp
from jax.experimental import pallas as pl
from jax.experimental.pallas import tpu as pltpu


def _round_up(x, m):
    return ((x + m - 1) // m) * m


def _vmem_budget_bytes():
    """~3/4 of this generation's physical VMEM (48 MiB v7x, 96 MiB v5e/v6e)."""
    try:
        cap = int(pltpu.get_tpu_info().vmem_capacity_bytes)
    except Exception:
        cap = 64 << 20  # conservative default: v7x per-TensorCore VMEM
    return (cap * 3) // 4


# ---------------------------------------------------------------------------
# Kernel bodies
# ---------------------------------------------------------------------------

def _eval_and_fuse(x, h_pre, be1, we2_row, be2, wfgx, wfgr, bfg, adj_ref):
    """eval_head tail (bias + ReLU, E->1 VPU reduce, sigmoid) + fusion_gate."""
    h = jnp.maximum(h_pre + be1, 0.0)                              # (TM, E) f32
    r_logit = jnp.sum(h * we2_row, axis=-1, keepdims=True) + be2   # (TM, 1)
    reward = jax.nn.sigmoid(r_logit)                               # (TM, 1) f32
    adj = jnp.dot(x, wfgx, preferred_element_type=jnp.float32)     # (TM, H) f32
    adj_ref[...] = (adj + reward * wfgr + bfg).astype(adj_ref.dtype)


def _pse_kernel_single(x_ref, wsim_ref, bsim_ref, we1_ref, be1_ref, we2_ref,
                       be2_ref, wfgx_ref, wfgr_ref, bfg_ref,
                       adj_ref, probs_ref, *, approx_recip):
    """One (TM, H) row tile; the whole vocab axis is resident in VMEM."""
    x = x_ref[...]                                                 # (TM, H)

    # sim_head + numerically-stable softmax (f32 accumulate, f32 softmax math).
    logits = jnp.dot(x, wsim_ref[...], preferred_element_type=jnp.float32)
    logits = logits + bsim_ref[...]                                # (TM, V) f32
    m = jnp.max(logits, axis=-1, keepdims=True)
    e = jnp.exp(logits - m)
    inv = pl.reciprocal(jnp.sum(e, axis=-1, keepdims=True), approx=approx_recip)
    probs = e * inv                                                # (TM, V) f32
    probs_ref[...] = probs.astype(probs_ref.dtype)

    # eval_head layer 1 (V -> E) on the MXU.
    h_pre = jnp.dot(probs.astype(we1_ref.dtype), we1_ref[...],
                    preferred_element_type=jnp.float32)            # (TM, E) f32

    _eval_and_fuse(x, h_pre, be1_ref[...], we2_ref[...], be2_ref[0, 0],
                   wfgx_ref[...], wfgr_ref[...], bfg_ref[...], adj_ref)


def _pse_kernel_vtiled(x_ref, wsim_ref, bsim_ref, we1_ref, be1_ref, we2_ref,
                       be2_ref, wfgx_ref, wfgr_ref, bfg_ref,
                       adj_ref, probs_ref, m_sc, l_sc, h_sc,
                       *, n_v, approx_recip):
    """Two-pass V-tiled path: inner grid axis jj in [0, 2*n_v).

    jj < n_v  : pass 0 -> running max / sum-exp over vocab blocks.
    jj >= n_v : pass 1 -> exact probs for block (jj - n_v), stream to HBM and
                accumulate probs @ W_eval1; finish on the last block.
    """
    jj = pl.program_id(1)
    x = x_ref[...]                                                 # (TM, H)
    logits = jnp.dot(x, wsim_ref[...], preferred_element_type=jnp.float32)
    logits = logits + bsim_ref[...]                                # (TM, TV) f32

    @pl.when(jj == 0)
    def _():
        m_sc[...] = jnp.full(m_sc.shape, -jnp.inf, m_sc.dtype)
        l_sc[...] = jnp.zeros(l_sc.shape, l_sc.dtype)
        h_sc[...] = jnp.zeros(h_sc.shape, h_sc.dtype)

    @pl.when(jj < n_v)                        # pass 0: softmax statistics
    def _():
        m_prev = m_sc[...]
        m_new = jnp.maximum(m_prev, jnp.max(logits, axis=-1, keepdims=True))
        l_sc[...] = (l_sc[...] * jnp.exp(m_prev - m_new)
                     + jnp.sum(jnp.exp(logits - m_new), axis=-1, keepdims=True))
        m_sc[...] = m_new

    @pl.when(jj >= n_v)                       # pass 1: exact probs + eval acc
    def _():
        inv = pl.reciprocal(l_sc[...], approx=approx_recip)
        p = jnp.exp(logits - m_sc[...]) * inv                      # (TM, TV) f32
        probs_ref[...] = p.astype(probs_ref.dtype)
        h_sc[...] += jnp.dot(p.astype(we1_ref.dtype), we1_ref[...],
                             preferred_element_type=jnp.float32)

    @pl.when(jj == 2 * n_v - 1)               # finalize on the last vocab block
    def _():
        _eval_and_fuse(x, h_sc[...], be1_ref[...], we2_ref[...], be2_ref[0, 0],
                       wfgx_ref[...], wfgr_ref[...], bfg_ref[...], adj_ref)


# ---------------------------------------------------------------------------
# Wrapper
# ---------------------------------------------------------------------------

def predictive_self_evaluator(hidden_state, params, *,
                              matmul_dtype=jnp.bfloat16,
                              probs_dtype=jnp.float32,
                              tile_m=1024,
                              vocab_block=None):
    """hidden_state (B,S,H) f32 -> (adjusted (B,S,H) f32, probs (B,S,V) probs_dtype)."""
    wsim, bsim, we1, be1, we2_row, be2, wfgx, wfgr, bfg = params
    B, S, H = hidden_state.shape
    V = wsim.shape[1]
    E = we1.shape[1]
    M = B * S

    matmul_dtype = jnp.dtype(matmul_dtype)
    probs_dtype = jnp.dtype(probs_dtype)
    approx_recip = (matmul_dtype == jnp.dtype(jnp.bfloat16))

    # MXU operands in matmul_dtype (no-op casts if already pre-cast).
    x2d = hidden_state.reshape(M, H).astype(matmul_dtype)
    wsim = wsim.astype(matmul_dtype)
    we1 = we1.astype(matmul_dtype)
    wfgx = wfgx.astype(matmul_dtype)

    xb = matmul_dtype.itemsize
    pb = probs_dtype.itemsize
    budget = _vmem_budget_bytes()

    # Resident small operands (double-buffered by the Pallas pipeline).
    small_w = 2 * (xb * H * H + 4 * (2 * E + 2 * H + 1))

    def _max_tm(tv, streamed_w):
        # Double-buffered row blocks (x in, adj out, probs out) + f32 live
        # temporaries (logits/exp/probs, eval hidden, adj) per row.
        per_row = 2 * (H * xb + H * 4 + tv * pb) + (3 * tv + E + 2 * H + 16) * 4
        left = budget - small_w - streamed_w
        return max((left // per_row) // 8 * 8, 0)

    # --- choose the vocab blocking -----------------------------------------
    full_streamed = 2 * (H * V * xb + V * 4 + V * E * xb)   # Wsim, bsim, We1
    if vocab_block is not None:
        tv = int(vocab_block)
        if tv >= V:
            tv = V
        elif V % tv != 0 or tv % 128 != 0:
            raise ValueError("vocab_block must be a multiple of 128 dividing V")
    elif _max_tm(V, full_streamed) >= 128:
        tv = V                       # everything fits: keep Wsim/We1 VMEM-resident
    else:
        tv = None
        t = 128
        while t < V:                 # largest 128-multiple divisor leaving TM >= 128
            if V % t == 0 and _max_tm(t, 2 * (H * t * xb + t * 4 + t * E * xb)) >= 128:
                tv = t
            t += 128
        if tv is None:
            tv = V                   # no nice divisor: fall back to full-V blocks
    n_v = 1 if tv >= V else V // tv

    # --- choose the row tile -------------------------------------------------
    streamed = full_streamed if n_v == 1 else 2 * (H * tv * xb + tv * 4 + tv * E * xb)
    half_cap = max(8, _round_up(pl.cdiv(M, 2), 8))  # >=2 row tiles => both v7x TCs busy
    tm = _max_tm(V if n_v == 1 else tv, streamed)
    tm = max(8, min(tm, int(tile_m), half_cap, _round_up(M, 8)))
    n_rows = pl.cdiv(M, tm)

    out_shape = (jax.ShapeDtypeStruct((M, H), jnp.float32),
                 jax.ShapeDtypeStruct((M, V), probs_dtype))
    smem_spec = pl.BlockSpec(memory_space=pltpu.MemorySpace.SMEM)

    if n_v == 1:
        row = lambda i: (i, 0)
        const = lambda i: (0, 0)
        cparams = pltpu.CompilerParams(dimension_semantics=("parallel",),
                                       vmem_limit_bytes=int(budget))
        adj, probs = pl.pallas_call(
            functools.partial(_pse_kernel_single, approx_recip=approx_recip),
            out_shape=out_shape,
            grid=(n_rows,),
            in_specs=[
                pl.BlockSpec((tm, H), row),     # hidden rows (pipelined)
                pl.BlockSpec((H, V), const),    # W_sim      (VMEM resident)
                pl.BlockSpec((1, V), const),    # b_sim
                pl.BlockSpec((V, E), const),    # W_eval1
                pl.BlockSpec((1, E), const),    # b_eval1
                pl.BlockSpec((1, E), const),    # W_eval2 as a row vector
                smem_spec,                      # b_eval2 scalar in SMEM
                pl.BlockSpec((H, H), const),    # W_fusion[:H, :]
                pl.BlockSpec((1, H), const),    # W_fusion[H, :] (reward column)
                pl.BlockSpec((1, H), const),    # b_fusion
            ],
            out_specs=(pl.BlockSpec((tm, H), row),
                       pl.BlockSpec((tm, V), row)),
            compiler_params=cparams,
        )(x2d, wsim, bsim, we1, be1, we2_row, be2, wfgx, wfgr, bfg)
    else:
        def vin(jj):    # vocab block used by the sim head in both passes
            return jnp.where(jj < n_v, jj, jj - n_v)

        def vout(jj):   # vocab block for pass-1-only operands (probs out, W_eval1)
            return jnp.where(jj < n_v, 0, jj - n_v)

        row2 = lambda i, jj: (i, 0)
        const2 = lambda i, jj: (0, 0)
        cparams = pltpu.CompilerParams(dimension_semantics=("parallel", "arbitrary"),
                                       vmem_limit_bytes=int(budget))
        adj, probs = pl.pallas_call(
            functools.partial(_pse_kernel_vtiled, n_v=n_v, approx_recip=approx_recip),
            out_shape=out_shape,
            grid=(n_rows, 2 * n_v),
            in_specs=[
                pl.BlockSpec((tm, H), row2),                          # hidden rows
                pl.BlockSpec((H, tv), lambda i, jj: (0, vin(jj))),    # W_sim block
                pl.BlockSpec((1, tv), lambda i, jj: (0, vin(jj))),    # b_sim block
                pl.BlockSpec((tv, E), lambda i, jj: (vout(jj), 0)),   # W_eval1 block
                pl.BlockSpec((1, E), const2),                         # b_eval1
                pl.BlockSpec((1, E), const2),                         # W_eval2 row
                smem_spec,                                            # b_eval2 scalar
                pl.BlockSpec((H, H), const2),                         # W_fusion[:H]
                pl.BlockSpec((1, H), const2),                         # W_fusion[H]
                pl.BlockSpec((1, H), const2),                         # b_fusion
            ],
            out_specs=(pl.BlockSpec((tm, H), row2),
                       pl.BlockSpec((tm, tv), lambda i, jj: (i, vout(jj)))),
            scratch_shapes=[pltpu.VMEM((tm, 1), jnp.float32),   # running max
                            pltpu.VMEM((tm, 1), jnp.float32),   # running sum-exp
                            pltpu.VMEM((tm, E), jnp.float32)],  # eval-hidden acc
            compiler_params=cparams,
        )(x2d, wsim, bsim, we1, be1, we2_row, be2, wfgx, wfgr, bfg)

    return adj.reshape(B, S, H), probs.reshape(B, S, V)


# ---------------------------------------------------------------------------
# Parameters / reference
# ---------------------------------------------------------------------------

def init_params(key, hidden_dim, vocab_size, eval_hidden=128):
    """Deterministic init mimicking nn.Linear default (uniform +/- 1/sqrt(fan_in))."""
    ks = jax.random.split(key, 8)

    def linear(kw, kb, fan_in, fan_out):
        bound = 1.0 / jnp.sqrt(fan_in)
        w = jax.random.uniform(kw, (fan_in, fan_out), jnp.float32, -bound, bound)
        b = jax.random.uniform(kb, (1, fan_out), jnp.float32, -bound, bound)
        return w, b

    wsim, bsim = linear(ks[0], ks[1], hidden_dim, vocab_size)        # (H,V), (1,V)
    we1, be1 = linear(ks[2], ks[3], vocab_size, eval_hidden)         # (V,E), (1,E)
    we2, be2 = linear(ks[4], ks[5], eval_hidden, 1)                  # (E,1), (1,1)
    wfg, bfg = linear(ks[6], ks[7], hidden_dim + 1, hidden_dim)      # (H+1,H), (1,H)

    we2_row = we2.T                                                  # (1, E)
    wfgx = wfg[:hidden_dim]                                          # (H, H)
    wfgr = wfg[hidden_dim:]                                          # (1, H)
    return (wsim, bsim, we1, be1, we2_row, be2, wfgx, wfgr, bfg)


def _reference(hidden_state, params):
    """Pure-JAX f32 reference matching the PyTorch forward (explicit concats)."""
    wsim, bsim, we1, be1, we2_row, be2, wfgx, wfgr, bfg = params
    logits = hidden_state @ wsim + bsim[0]
    probs = jax.nn.softmax(logits, axis=-1)
    h = jnp.maximum(probs @ we1 + be1[0], 0.0)
    rewards = jax.nn.sigmoid(h @ we2_row[0][:, None] + be2[0, 0])    # (..., 1)
    wfg_full = jnp.concatenate([wfgx, wfgr], axis=0)                 # (H+1, H)
    aug = jnp.concatenate([hidden_state, rewards], axis=-1)          # (..., H+1)
    adjusted = aug @ wfg_full + bfg[0]
    return adjusted, probs


if __name__ == "__main__":
    batch, seq, hidden_dim, vocab_size = 2, 8, 32, 64

    key = jax.random.PRNGKey(0)
    k_x, k_p = jax.random.split(key)
    hidden_state = jax.random.normal(k_x, (batch, seq, hidden_dim), jnp.float32)
    params = init_params(k_p, hidden_dim, vocab_size)
    ref_adj, ref_probs = _reference(hidden_state, params)

    # 1) Exact path (f32 matmuls, f32 probs): matches the PyTorch module to 1e-4.
    adj, probs = predictive_self_evaluator(
        hidden_state, params, matmul_dtype=jnp.float32, probs_dtype=jnp.float32)
    adj, probs = jax.block_until_ready((adj, probs))
    assert adj.shape == (batch, seq, hidden_dim)
    assert probs.shape == (batch, seq, vocab_size)
    assert jnp.allclose(probs, ref_probs, atol=1e-4, rtol=1e-4)
    assert jnp.allclose(adj, ref_adj, atol=1e-4, rtol=1e-4)

    # 2) Fast path (default bf16 MXU feeds, bf16 probs writeback): looser check.
    adj_bf, probs_bf = predictive_self_evaluator(
        hidden_state, params, probs_dtype=jnp.bfloat16)
    adj_bf, probs_bf = jax.block_until_ready((adj_bf, probs_bf))
    assert probs_bf.dtype == jnp.bfloat16
    assert jnp.allclose(probs_bf.astype(jnp.float32), ref_probs, atol=3e-2, rtol=3e-2)
    assert jnp.allclose(adj_bf, ref_adj, atol=3e-2, rtol=3e-2)

    # 3) V-tiled two-pass path (vocab_block forces n_v > 1), exact f32 check.
    vocab_big = 512
    k_x2, k_p2 = jax.random.split(jax.random.PRNGKey(1))
    hs2 = jax.random.normal(k_x2, (batch, seq, hidden_dim), jnp.float32)
    params2 = init_params(k_p2, hidden_dim, vocab_big)
    ref_adj2, ref_probs2 = _reference(hs2, params2)
    adj2, probs2 = predictive_self_evaluator(
        hs2, params2, matmul_dtype=jnp.float32, probs_dtype=jnp.float32,
        vocab_block=128)
    adj2, probs2 = jax.block_until_ready((adj2, probs2))
    assert jnp.allclose(probs2, ref_probs2, atol=1e-4, rtol=1e-4)
    assert jnp.allclose(adj2, ref_adj2, atol=1e-4, rtol=1e-4)

    print("KERNEL_OK")
</pallas_src>

<mosaic_0001>
module attributes {stable_mosaic.version = 11 : i64} {
  func.func @_pse_kernel_single(%arg0: i32, %arg1: memref<8x32xf32, #tpu.memory_space<vmem>>, %arg2: memref<32x64xf32, #tpu.memory_space<vmem>>, %arg3: memref<1x64xf32, #tpu.memory_space<vmem>>, %arg4: memref<64x128xf32, #tpu.memory_space<vmem>>, %arg5: memref<1x128xf32, #tpu.memory_space<vmem>>, %arg6: memref<1x128xf32, #tpu.memory_space<vmem>>, %arg7: memref<1x1xf32, #tpu.memory_space<smem>>, %arg8: memref<32x32xf32, #tpu.memory_space<vmem>>, %arg9: memref<1x32xf32, #tpu.memory_space<vmem>>, %arg10: memref<1x32xf32, #tpu.memory_space<vmem>>, %arg11: memref<8x32xf32, #tpu.memory_space<vmem>>, %arg12: memref<8x64xf32, #tpu.memory_space<vmem>>) attributes {dimension_semantics = [#tpu.dimension_semantics<parallel>], iteration_bounds = array<i64: 2>, scalar_prefetch = 0 : i64, scratch_operands = 0 : i64, tpu.core_type = #tpu.core_type<tc>, window_params = [{transform_indices = @transform_0, window_bounds = array<i64: 8, 32>}, {pipeline_mode = #tpu.pipeline_mode<synchronous>, transform_indices = @transform_1, window_bounds = array<i64: 32, 64>}, {pipeline_mode = #tpu.pipeline_mode<synchronous>, transform_indices = @transform_2, window_bounds = array<i64: 1, 64>}, {pipeline_mode = #tpu.pipeline_mode<synchronous>, transform_indices = @transform_3, window_bounds = array<i64: 64, 128>}, {pipeline_mode = #tpu.pipeline_mode<synchronous>, transform_indices = @transform_4, window_bounds = array<i64: 1, 128>}, {pipeline_mode = #tpu.pipeline_mode<synchronous>, transform_indices = @transform_5, window_bounds = array<i64: 1, 128>}, {transform_indices = @transform_6, window_bounds = array<i64: 1, 1>}, {pipeline_mode = #tpu.pipeline_mode<synchronous>, transform_indices = @transform_7, window_bounds = array<i64: 32, 32>}, {pipeline_mode = #tpu.pipeline_mode<synchronous>, transform_indices = @transform_8, window_bounds = array<i64: 1, 32>}, {pipeline_mode = #tpu.pipeline_mode<synchronous>, transform_indices = @transform_9, window_bounds = array<i64: 1, 32>}, {transform_indices = @transform_10, window_bounds = array<i64: 8, 32>}, {transform_indices = @transform_11, window_bounds = array<i64: 8, 64>}]} {
    %c0 = arith.constant 0 : index
    %c0_0 = arith.constant 0 : index
    %0 = vector.load %arg1[%c0, %c0_0] : memref<8x32xf32, #tpu.memory_space<vmem>>, vector<8x32xf32>
    %c0_1 = arith.constant 0 : index
    %c0_2 = arith.constant 0 : index
    %1 = vector.load %arg2[%c0_1, %c0_2] : memref<32x64xf32, #tpu.memory_space<vmem>>, vector<32x64xf32>
    %cst = arith.constant dense<0.000000e+00> : vector<8x64xf32>
    %2 = tpu.matmul %0, %1, %cst {dimension_numbers = #tpu.dot_dimension_numbers<[1], [0], [0], [1], [0, 0, 1, 1], [], []>} : vector<8x32xf32>, vector<32x64xf32>, vector<8x64xf32> -> vector<8x64xf32>
    %c0_3 = arith.constant 0 : index
    %c0_4 = arith.constant 0 : index
    %3 = vector.load %arg3[%c0_3, %c0_4] : memref<1x64xf32, #tpu.memory_space<vmem>>, vector<1x64xf32>
    %4 = vector.broadcast %3 : vector<1x64xf32> to vector<8x64xf32>
    %5 = arith.addf %2, %4 : vector<8x64xf32>
    %cst_5 = arith.constant dense<0xFF800000> : vector<8xf32>
    %6 = vector.multi_reduction <maximumf>, %5, %cst_5 [1] : vector<8x64xf32> to vector<8xf32>
    %7 = vector.shape_cast %6 : vector<8xf32> to vector<8x1xf32>
    %8 = vector.broadcast %7 : vector<8x1xf32> to vector<8x64xf32>
    %9 = arith.subf %5, %8 : vector<8x64xf32>
    %10 = math.exp %9 : vector<8x64xf32>
    %cst_6 = arith.constant dense<0.000000e+00> : vector<8xf32>
    %11 = vector.multi_reduction <add>, %10, %cst_6 [1] : vector<8x64xf32> to vector<8xf32>
    %12 = vector.shape_cast %11 : vector<8xf32> to vector<8x1xf32>
    %13 = tpu.reciprocal %12 : vector<8x1xf32> -> vector<8x1xf32>
    %14 = vector.broadcast %13 : vector<8x1xf32> to vector<8x64xf32>
    %15 = arith.mulf %10, %14 : vector<8x64xf32>
    %c0_7 = arith.constant 0 : index
    %c0_8 = arith.constant 0 : index
    %16 = vector.load %arg12[%c0_7, %c0_8] : memref<8x64xf32, #tpu.memory_space<vmem>>, vector<8x64xf32>
    tpu.vector_store %arg12[%c0_7, %c0_8], %15 {strides = array<i32>} : memref<8x64xf32, #tpu.memory_space<vmem>>, vector<8x64xf32>,
    %c0_9 = arith.constant 0 : index
    %c0_10 = arith.constant 0 : index
    %17 = vector.load %arg4[%c0_9, %c0_10] : memref<64x128xf32, #tpu.memory_space<vmem>>, vector<64x128xf32>
    %cst_11 = arith.constant dense<0.000000e+00> : vector<8x128xf32>
    %18 = tpu.matmul %15, %17, %cst_11 {dimension_numbers = #tpu.dot_dimension_numbers<[1], [0], [0], [1], [0, 0, 1, 1], [], []>} : vector<8x64xf32>, vector<64x128xf32>, vector<8x128xf32> -> vector<8x128xf32>
    %c0_12 = arith.constant 0 : index
    %c0_13 = arith.constant 0 : index
    %19 = vector.load %arg5[%c0_12, %c0_13] : memref<1x128xf32, #tpu.memory_space<vmem>>, vector<1x128xf32>
    %c0_14 = arith.constant 0 : index
    %c0_15 = arith.constant 0 : index
    %20 = vector.load %arg6[%c0_14, %c0_15] : memref<1x128xf32, #tpu.memory_space<vmem>>, vector<1x128xf32>
    %c0_16 = arith.constant 0 : index
    %c0_17 = arith.constant 0 : index
    %21 = memref.load %arg7[%c0_16, %c0_17] : memref<1x1xf32, #tpu.memory_space<smem>>
    %c0_18 = arith.constant 0 : index
    %c0_19 = arith.constant 0 : index
    %22 = vector.load %arg8[%c0_18, %c0_19] : memref<32x32xf32, #tpu.memory_space<vmem>>, vector<32x32xf32>
    %c0_20 = arith.constant 0 : index
    %c0_21 = arith.constant 0 : index
    %23 = vector.load %arg9[%c0_20, %c0_21] : memref<1x32xf32, #tpu.memory_space<vmem>>, vector<1x32xf32>
    %c0_22 = arith.constant 0 : index
    %c0_23 = arith.constant 0 : index
    %24 = vector.load %arg10[%c0_22, %c0_23] : memref<1x32xf32, #tpu.memory_space<vmem>>, vector<1x32xf32>
    %25 = vector.broadcast %19 : vector<1x128xf32> to vector<8x128xf32>
    %26 = arith.addf %18, %25 : vector<8x128xf32>
    %cst_24 = arith.constant 0.000000e+00 : f32
    %27 = vector.broadcast %cst_24 : f32 to vector<8x128xf32>
    %28 = arith.maximumf %26, %27 : vector<8x128xf32>
    %29 = vector.broadcast %20 : vector<1x128xf32> to vector<8x128xf32>
    %30 = arith.mulf %28, %29 : vector<8x128xf32>
    %cst_25 = arith.constant dense<0.000000e+00> : vector<8xf32>
    %31 = vector.multi_reduction <add>, %30, %cst_25 [1] : vector<8x128xf32> to vector<8xf32>
    %32 = vector.shape_cast %31 : vector<8xf32> to vector<8x1xf32>
    %33 = vector.broadcast %21 : f32 to vector<8x1xf32>
    %34 = arith.addf %32, %33 : vector<8x1xf32>
    %35 = arith.negf %34 : vector<8x1xf32>
    %36 = math.exp %35 : vector<8x1xf32>
    %cst_26 = arith.constant 1.000000e+00 : f32
    %37 = vector.broadcast %cst_26 : f32 to vector<8x1xf32>
    %38 = arith.addf %37, %36 : vector<8x1xf32>
    %39 = arith.divf %37, %38 : vector<8x1xf32>
    %cst_27 = arith.constant dense<0.000000e+00> : vector<8x32xf32>
    %40 = tpu.matmul %0, %22, %cst_27 {dimension_numbers = #tpu.dot_dimension_numbers<[1], [0], [0], [1], [0, 0, 1, 1], [], []>} : vector<8x32xf32>, vector<32x32xf32>, vector<8x32xf32> -> vector<8x32xf32>
    %41 = vector.broadcast %39 : vector<8x1xf32> to vector<8x32xf32>
    %42 = vector.broadcast %23 : vector<1x32xf32> to vector<8x32xf32>
    %43 = arith.mulf %41, %42 : vector<8x32xf32>
    %44 = arith.addf %40, %43 : vector<8x32xf32>
    %45 = vector.broadcast %24 : vector<1x32xf32> to vector<8x32xf32>
    %46 = arith.addf %44, %45 : vector<8x32xf32>
    %c0_28 = arith.constant 0 : index
    %c0_29 = arith.constant 0 : index
    %47 = vector.load %arg11[%c0_28, %c0_29] : memref<8x32xf32, #tpu.memory_space<vmem>>, vector<8x32xf32>
    tpu.vector_store %arg11[%c0_28, %c0_29], %46 {strides = array<i32>} : memref<8x32xf32, #tpu.memory_space<vmem>>, vector<8x32xf32>,
    return
  }
  func.func @transform_0(%arg0: i32) -> (i32, i32) {
    %c0_i32 = arith.constant 0 : i32
    %c0_i32_0 = arith.constant 0 : i32
    return %arg0, %c0_i32 : i32, i32
  }
  func.func @transform_1(%arg0: i32) -> (i32, i32) {
    %c0_i32 = arith.constant 0 : i32
    %c0_i32_0 = arith.constant 0 : i32
    %c0_i32_1 = arith.constant 0 : i32
    return %c0_i32, %c0_i32_0 : i32, i32
  }
  func.func @transform_2(%arg0: i32) -> (i32, i32) {
    %c0_i32 = arith.constant 0 : i32
    %c0_i32_0 = arith.constant 0 : i32
    %c0_i32_1 = arith.constant 0 : i32
    return %c0_i32, %c0_i32_0 : i32, i32
  }
  func.func @transform_3(%arg0: i32) -> (i32, i32) {
    %c0_i32 = arith.constant 0 : i32
    %c0_i32_0 = arith.constant 0 : i32
    %c0_i32_1 = arith.constant 0 : i32
    return %c0_i32, %c0_i32_0 : i32, i32
  }
  func.func @transform_4(%arg0: i32) -> (i32, i32) {
    %c0_i32 = arith.constant 0 : i32
    %c0_i32_0 = arith.constant 0 : i32
    %c0_i32_1 = arith.constant 0 : i32
    return %c0_i32, %c0_i32_0 : i32, i32
  }
  func.func @transform_5(%arg0: i32) -> (i32, i32) {
    %c0_i32 = arith.constant 0 : i32
    %c0_i32_0 = arith.constant 0 : i32
    %c0_i32_1 = arith.constant 0 : i32
    return %c0_i32, %c0_i32_0 : i32, i32
  }
  func.func @transform_6(%arg0: i32) -> (i32, i32) {
    %c0_i32 = arith.constant 0 : i32
    %c0_i32_0 = arith.constant 0 : i32
    %c0_i32_1 = arith.constant 0 : i32
    return %c0_i32, %c0_i32_0 : i32, i32
  }
  func.func @transform_7(%arg0: i32) -> (i32, i32) {
    %c0_i32 = arith.constant 0 : i32
    %c0_i32_0 = arith.constant 0 : i32
    %c0_i32_1 = arith.constant 0 : i32
    return %c0_i32, %c0_i32_0 : i32, i32
  }
  func.func @transform_8(%arg0: i32) -> (i32, i32) {
    %c0_i32 = arith.constant 0 : i32
    %c0_i32_0 = arith.constant 0 : i32
    %c0_i32_1 = arith.constant 0 : i32
    return %c0_i32, %c0_i32_0 : i32, i32
  }
  func.func @transform_9(%arg0: i32) -> (i32, i32) {
    %c0_i32 = arith.constant 0 : i32
    %c0_i32_0 = arith.constant 0 : i32
    %c0_i32_1 = arith.constant 0 : i32
    return %c0_i32, %c0_i32_0 : i32, i32
  }
  func.func @transform_10(%arg0: i32) -> (i32, i32) {
    %c0_i32 = arith.constant 0 : i32
    %c0_i32_0 = arith.constant 0 : i32
    return %arg0, %c0_i32 : i32, i32
  }
  func.func @transform_11(%arg0: i32) -> (i32, i32) {
    %c0_i32 = arith.constant 0 : i32
    %c0_i32_0 = arith.constant 0 : i32
    return %arg0, %c0_i32 : i32, i32
  }
}

</mosaic_0001>

<llo_original>
// kernel: tpu_custom_call.1
$region0: #{tpu_custom_call.1}
  #allocation0 [shape = 'u32[]', space=smem, size = 0x4, offset = 0x4, fixed_abs, tag = 'smem constant byte address 0x4 - core index']
  #allocation1 [shape = 'u32[72,128]{1,0:T(1,128)}', space=vmem, size = 0x9000, scoped, tag = 'internal scratch']
  #allocation2 [shape = 'f32[1,1]{1,0:T(1,128)S(6)}', space=smem, size = 0x200, scoped, tag = 'scoped memory for tpu_custom_call.1']
  %s0 = inlined_call_operand.hbm [shape: f32[16,32], index: 0, kind: input, shape index: {}]
  %s1 = inlined_call_operand.hbm [shape: f32[32,64], index: 1, kind: input, shape index: {}]
  %s2 = inlined_call_operand.vmem [shape: f32[1,64], index: 2, kind: input, shape index: {}]
  %s3 = inlined_call_operand.hbm [shape: f32[64,128], index: 3, kind: input, shape index: {}]
  %s4 = inlined_call_operand.vmem [shape: f32[1,128], index: 4, kind: input, shape index: {}]
  %s5 = inlined_call_operand.vmem [shape: f32[1,128], index: 5, kind: input, shape index: {}]
  %s6 = inlined_call_operand.<no memory space> [shape: f32[1,1], index: 6, kind: input, shape index: {}]
  %s7 = inlined_call_operand.hbm [shape: f32[32,32], index: 7, kind: input, shape index: {}]
  %s8 = inlined_call_operand.vmem [shape: f32[1,32], index: 8, kind: input, shape index: {}]
  %s9 = inlined_call_operand.vmem [shape: f32[1,32], index: 9, kind: input, shape index: {}]
  %s10 = inlined_call_operand.hbm [shape: f32[16,32], index: 10, kind: output, shape index: {0}]
  %s11 = inlined_call_operand.hbm [shape: f32[16,64], index: 11, kind: output, shape index: {1}]
  %12 = xla_tuple %s10, %s11
  %s13 = sld [smem:[#allocation0]]
  $region97: #{tpu_custom_call.1} parent=0
    _
  %s15 = ssub.s32 1, %s13
  %s16 = scalar_select 0, %s15, %s13
  %17 = sst [smem:[#allocation2]] %s6
  $region1: #{tpu_custom_call.1} parent=0
    #allocation3 [shape = 'u8[8192]{0}', space=vmem, size = 0x2000, scoped, tag = 'input window, operand 0']
    #allocation4 [shape = 's32[2]{0}', space=sflag, size = 0x8, scoped, tag = 'scoped memory for tpu_custom_call.1']
    #allocation5 [shape = 's32[2]{0}', space=sflag, size = 0x8, scoped, tag = 'scoped memory for tpu_custom_call.1']
    #allocation6 [shape = 'u8[16384]{0}', space=vmem, size = 0x4000, scoped, tag = 'input window, operand 1, single buffered']
    #allocation7 [shape = 's32[1]{0}', space=sflag, size = 0x4, scoped, tag = 'scoped memory for tpu_custom_call.1']
    #allocation8 [shape = 'u8[32768]{0}', space=vmem, size = 0x8000, scoped, tag = 'input window, operand 3, single buffered']
    #allocation9 [shape = 'u8[16384]{0}', space=vmem, size = 0x4000, scoped, tag = 'input window, operand 7, single buffered']
    #allocation10 [shape = 's32[1]{0}', space=sflag, size = 0x4, scoped, tag = 'scoped memory for tpu_custom_call.1']
    #allocation11 [shape = 'u8[8192]{0}', space=vmem, size = 0x2000, scoped, tag = 'output window, operand 0']
    #allocation12 [shape = 'u8[8192]{0}', space=vmem, size = 0x2000, scoped, tag = 'output window, operand 1']
    #allocation13 [shape = 's32[2]{0}', space=sflag, size = 0x8, scoped, tag = 'scoped memory for tpu_custom_call.1']
    %18 = vsyncpa [#allocation4], 0
    %s19 = scalar_lea.sflag [#allocation4], 1
    %20 = vsyncpa %s19, 0
    %21 = vsyncpa [#allocation7], 0
    %22 = vsyncpa [#allocation10], 0
    %23 = vsyncpa [#allocation5], 0
    %s24 = scalar_lea.sflag [#allocation5], 1
    %25 = vsyncpa %s24, 0
    %26 = vsyncpa [#allocation13], 0
    %s27 = scalar_lea.sflag [#allocation13], 1
    %28 = vsyncpa %s27, 0
    loop: start=0, step=1, limit=4
    $region2: #{tpu_custom_call.1} parent=1 // loop_pre_header
      _
    $region3: #{tpu_custom_call.1} parent=1 // loop_header
      %s30 = sphi 0, %s34
      %p31 = scmp.ge.s32.totalorder %s30, 4
      %s40 = sphi 0, %s42
      %s43 = sphi 0, %s40
      %s44 = sphi 0, %s43
      %s60 = sphi 0, %s44
      %s64 = sphi 0, %s64
      %s66 = sphi 0, %s64
      %s67 = sphi 0, %s66
      %s81 = sphi 0, %s67
      %s85 = sphi 0, %s85
      %s87 = sphi 0, %s85
      %s88 = sphi 0, %s87
      %s102 = sphi 0, %s88
      %s106 = sphi 0, %s106
      %s108 = sphi 0, %s106
      %s109 = sphi 0, %s108
      %s123 = sphi 0, %s109
      %s127 = sphi 0, %s127
      %s129 = sphi 0, %s127
      %s130 = sphi 0, %s129
      %s144 = sphi 0, %s130
      %s148 = sphi 0, %s148
      %s150 = sphi 0, %s148
      %s151 = sphi 0, %s150
      %s165 = sphi 0, %s151
      %s169 = sphi 0, %s169
      %s171 = sphi 0, %s169
      %s172 = sphi 0, %s171
      %s186 = sphi 0, %s172
      %s190 = sphi 0, %s190
      %s192 = sphi 0, %s190
      %s193 = sphi 0, %s192
      %s207 = sphi 0, %s193
      %s211 = sphi 0, %s211
      %s213 = sphi 0, %s211
      %s214 = sphi 0, %s213
      %s228 = sphi 0, %s214
      %s232 = sphi 0, %s232
      %s234 = sphi 0, %s232
      %s235 = sphi 0, %s234
      %s249 = sphi 0, %s235
      %s255 = sphi 0, %s257
      %s258 = sphi 0, %s255
      %s259 = sphi 0, %s258
      %s275 = sphi 0, %s259
      %s281 = sphi 0, %s283
      %s284 = sphi 0, %s281
      %s285 = sphi 0, %s284
      %s301 = sphi 0, %s285
    $region4: #{tpu_custom_call.1} parent=1 // loop_header_branch
      %33 = sbr.rel (%p31) target = $region8
    $region5: #{tpu_custom_call.1} parent=1 // loop_body
      %s35 = ssub.s32 %s30, 1
      %s36 = ssub.s32 %s30, 2
      %s37 = sadd.s32 %s30, 1
      %s38 = ssub.s32 %s30, %s37
      %p39 = scmp.eq.s32.totalorder %s38, 0
      %s41 = sadd.s32 %s40, 1
      %s42 = scalar_select %p39, %s40, %s41
      %p45 = pneg %p39
      %p46 = scmp.eq.s32.totalorder %s30, 1
      %p47 = por %p45, %p46
      %p48 = scmp.ne.s32.totalorder %s40, %s43
      %p49 = scmp.eq.s32.totalorder %s30, 0
      %p50 = por %p48, %p49
      %p51 = scmp.ne.s32.totalorder %s40, %s43
      %p52 = scmp.eq.s32.totalorder %s35, 1
      %p53 = por %p51, %p52
      %p54 = scmp.ne.s32.totalorder %s43, %s44
      %p55 = scmp.eq.s32.totalorder %s35, 0
      %p56 = por %p54, %p55
      %p57 = scmp.ne.s32.totalorder %s43, %s44
      %p58 = scmp.eq.s32.totalorder %s36, 1
      %p59 = por %p57, %p58
      %p61 = scmp.ne.s32.totalorder %s44, %s60
      %p62 = scmp.eq.s32.totalorder %s36, 0
      %p63 = por %p61, %p62
      %s65 = sadd.s32 %s64, 1
      %p68 = scmp.eq.s32.totalorder %s30, 1
      %p69 = scmp.ne.s32.totalorder %s64, %s66
      %p70 = scmp.eq.s32.totalorder %s30, 0
      %p71 = por %p69, %p70
      %p72 = scmp.ne.s32.totalorder %s64, %s66
      %p73 = scmp.eq.s32.totalorder %s35, 1
      %p74 = por %p72, %p73
      %p75 = scmp.ne.s32.totalorder %s66, %s67
      %p76 = scmp.eq.s32.totalorder %s35, 0
      %p77 = por %p75, %p76
      %p78 = scmp.ne.s32.totalorder %s66, %s67
      %p79 = scmp.eq.s32.totalorder %s36, 1
      %p80 = por %p78, %p79
      %p82 = scmp.ne.s32.totalorder %s67, %s81
      %p83 = scmp.eq.s32.totalorder %s36, 0
      %p84 = por %p82, %p83
      %s86 = sadd.s32 %s85, 1
      %p89 = scmp.eq.s32.totalorder %s30, 1
      %p90 = scmp.ne.s32.totalorder %s85, %s87
      %p91 = scmp.eq.s32.totalorder %s30, 0
      %p92 = por %p90, %p91
      %p93 = scmp.ne.s32.totalorder %s85, %s87
      %p94 = scmp.eq.s32.totalorder %s35, 1
      %p95 = por %p93, %p94
      %p96 = scmp.ne.s32.totalorder %s87, %s88
      %p97 = scmp.eq.s32.totalorder %s35, 0
      %p98 = por %p96, %p97
      %p99 = scmp.ne.s32.totalorder %s87, %s88
      %p100 = scmp.eq.s32.totalorder %s36, 1
      %p101 = por %p99, %p100
      %p103 = scmp.ne.s32.totalorder %s88, %s102
      %p104 = scmp.eq.s32.totalorder %s36, 0
      %p105 = por %p103, %p104
      %s107 = sadd.s32 %s106, 1
      %p110 = scmp.eq.s32.totalorder %s30, 1
      %p111 = scmp.ne.s32.totalorder %s106, %s108
      %p112 = scmp.eq.s32.totalorder %s30, 0
      %p113 = por %p111, %p112
      %p114 = scmp.ne.s32.totalorder %s106, %s108
      %p115 = scmp.eq.s32.totalorder %s35, 1
      %p116 = por %p114, %p115
      %p117 = scmp.ne.s32.totalorder %s108, %s109
      %p118 = scmp.eq.s32.totalorder %s35, 0
      %p119 = por %p117, %p118
      %p120 = scmp.ne.s32.totalorder %s108, %s109
      %p121 = scmp.eq.s32.totalorder %s36, 1
      %p122 = por %p120, %p121
      %p124 = scmp.ne.s32.totalorder %s109, %s123
      %p125 = scmp.eq.s32.totalorder %s36, 0
      %p126 = por %p124, %p125
      %s128 = sadd.s32 %s127, 1
      %p131 = scmp.eq.s32.totalorder %s30, 1
      %p132 = scmp.ne.s32.totalorder %s127, %s129
      %p133 = scmp.eq.s32.totalorder %s30, 0
      %p134 = por %p132, %p133
      %p135 = scmp.ne.s32.totalorder %s127, %s129
      %p136 = scmp.eq.s32.totalorder %s35, 1
      %p137 = por %p135, %p136
      %p138 = scmp.ne.s32.totalorder %s129, %s130
      %p139 = scmp.eq.s32.totalorder %s35, 0
      %p140 = por %p138, %p139
      %p141 = scmp.ne.s32.totalorder %s129, %s130
      %p142 = scmp.eq.s32.totalorder %s36, 1
      %p143 = por %p141, %p142
      %p145 = scmp.ne.s32.totalorder %s130, %s144
      %p146 = scmp.eq.s32.totalorder %s36, 0
      %p147 = por %p145, %p146
      %s149 = sadd.s32 %s148, 1
      %p152 = scmp.eq.s32.totalorder %s30, 1
      %p153 = scmp.ne.s32.totalorder %s148, %s150
      %p154 = scmp.eq.s32.totalorder %s30, 0
      %p155 = por %p153, %p154
      %p156 = scmp.ne.s32.totalorder %s148, %s150
      %p157 = scmp.eq.s32.totalorder %s35, 1
      %p158 = por %p156, %p157
      %p159 = scmp.ne.s32.totalorder %s150, %s151
      %p160 = scmp.eq.s32.totalorder %s35, 0
      %p161 = por %p159, %p160
      %p162 = scmp.ne.s32.totalorder %s150, %s151
      %p163 = scmp.eq.s32.totalorder %s36, 1
      %p164 = por %p162, %p163
      %p166 = scmp.ne.s32.totalorder %s151, %s165
      %p167 = scmp.eq.s32.totalorder %s36, 0
      %p168 = por %p166, %p167
      %s170 = sadd.s32 %s169, 1
      %p173 = scmp.eq.s32.totalorder %s30, 1
      %p174 = scmp.ne.s32.totalorder %s169, %s171
      %p175 = scmp.eq.s32.totalorder %s30, 0
      %p176 = por %p174, %p175
      %p177 = scmp.ne.s32.totalorder %s169, %s171
      %p178 = scmp.eq.s32.totalorder %s35, 1
      %p179 = por %p177, %p178
      %p180 = scmp.ne.s32.totalorder %s171, %s172
      %p181 = scmp.eq.s32.totalorder %s35, 0
      %p182 = por %p180, %p181
      %p183 = scmp.ne.s32.totalorder %s171, %s172
      %p184 = scmp.eq.s32.totalorder %s36, 1
      %p185 = por %p183, %p184
      %p187 = scmp.ne.s32.totalorder %s172, %s186
      %p188 = scmp.eq.s32.totalorder %s36, 0
      %p189 = por %p187, %p188
      %s191 = sadd.s32 %s190, 1
      %p194 = scmp.eq.s32.totalorder %s30, 1
      %p195 = scmp.ne.s32.totalorder %s190, %s192
      %p196 = scmp.eq.s32.totalorder %s30, 0
      %p197 = por %p195, %p196
      %p198 = scmp.ne.s32.totalorder %s190, %s192
      %p199 = scmp.eq.s32.totalorder %s35, 1
      %p200 = por %p198, %p199
      %p201 = scmp.ne.s32.totalorder %s192, %s193
      %p202 = scmp.eq.s32.totalorder %s35, 0
      %p203 = por %p201, %p202
      %p204 = scmp.ne.s32.totalorder %s192, %s193
      %p205 = scmp.eq.s32.totalorder %s36, 1
      %p206 = por %p204, %p205
      %p208 = scmp.ne.s32.totalorder %s193, %s207
      %p209 = scmp.eq.s32.totalorder %s36, 0
      %p210 = por %p208, %p209
      %s212 = sadd.s32 %s211, 1
      %p215 = scmp.eq.s32.totalorder %s30, 1
      %p216 = scmp.ne.s32.totalorder %s211, %s213
      %p217 = scmp.eq.s32.totalorder %s30, 0
      %p218 = por %p216, %p217
      %p219 = scmp.ne.s32.totalorder %s211, %s213
      %p220 = scmp.eq.s32.totalorder %s35, 1
      %p221 = por %p219, %p220
      %p222 = scmp.ne.s32.totalorder %s213, %s214
      %p223 = scmp.eq.s32.totalorder %s35, 0
      %p224 = por %p222, %p223
      %p225 = scmp.ne.s32.totalorder %s213, %s214
      %p226 = scmp.eq.s32.totalorder %s36, 1
      %p227 = por %p225, %p226
      %p229 = scmp.ne.s32.totalorder %s214, %s228
      %p230 = scmp.eq.s32.totalorder %s36, 0
      %p231 = por %p229, %p230
      %s233 = sadd.s32 %s232, 1
      %p236 = scmp.eq.s32.totalorder %s30, 1
      %p237 = scmp.ne.s32.totalorder %s232, %s234
      %p238 = scmp.eq.s32.totalorder %s30, 0
      %p239 = por %p237, %p238
      %p240 = scmp.ne.s32.totalorder %s232, %s234
      %p241 = scmp.eq.s32.totalorder %s35, 1
      %p242 = por %p240, %p241
      %p243 = scmp.ne.s32.totalorder %s234, %s235
      %p244 = scmp.eq.s32.totalorder %s35, 0
      %p245 = por %p243, %p244
      %p246 = scmp.ne.s32.totalorder %s234, %s235
      %p247 = scmp.eq.s32.totalorder %s36, 1
      %p248 = por %p246, %p247
      %p250 = scmp.ne.s32.totalorder %s235, %s249
      %p251 = scmp.eq.s32.totalorder %s36, 0
      %p252 = por %p250, %p251
      %s253 = ssub.s32 %s30, %s37
      %p254 = scmp.eq.s32.totalorder %s253, 0
      %s256 = sadd.s32 %s255, 1
      %s257 = scalar_select %p254, %s255, %s256
      %p260 = pneg %p254
      %p261 = scmp.eq.s32.totalorder %s30, 1
      %p262 = por %p260, %p261
      %p263 = scmp.ne.s32.totalorder %s255, %s258
      %p264 = scmp.eq.s32.totalorder %s30, 0
      %p265 = por %p263, %p264
      %p266 = scmp.ne.s32.totalorder %s255, %s258
      %p267 = scmp.eq.s32.totalorder %s35, 1
      %p268 = por %p266, %p267
      %p269 = scmp.ne.s32.totalorder %s258, %s259
      %p270 = scmp.eq.s32.totalorder %s35, 0
      %p271 = por %p269, %p270
      %p272 = scmp.ne.s32.totalorder %s258, %s259
      %p273 = scmp.eq.s32.totalorder %s36, 1
      %p274 = por %p272, %p273
      %p276 = scmp.ne.s32.totalorder %s259, %s275
      %p277 = scmp.eq.s32.totalorder %s36, 0
      %p278 = por %p276, %p277
      %s279 = ssub.s32 %s30, %s37
      %p280 = scmp.eq.s32.totalorder %s279, 0
      %s282 = sadd.s32 %s281, 1
      %s283 = scalar_select %p280, %s281, %s282
      %p286 = pneg %p280
      %p287 = scmp.eq.s32.totalorder %s30, 1
      %p288 = por %p286, %p287
      %p289 = scmp.ne.s32.totalorder %s281, %s284
      %p290 = scmp.eq.s32.totalorder %s30, 0
      %p291 = por %p289, %p290
      %p292 = scmp.ne.s32.totalorder %s281, %s284
      %p293 = scmp.eq.s32.totalorder %s35, 1
      %p294 = por %p292, %p293
      %p295 = scmp.ne.s32.totalorder %s284, %s285
      %p296 = scmp.eq.s32.totalorder %s35, 0
      %p297 = por %p295, %p296
      %p298 = scmp.ne.s32.totalorder %s284, %s285
      %p299 = scmp.eq.s32.totalorder %s36, 1
      %p300 = por %p298, %p299
      %p302 = scmp.ne.s32.totalorder %s285, %s301
      %p303 = scmp.eq.s32.totalorder %s36, 0
      %p304 = por %p302, %p303
      %p305 = scmp.le.s32.totalorder 1, %s30
      %p306 = scmp.lt.s32.totalorder %s30, 3
      %p307 = pnand %p305, %p306
      %p308 = pneg %p307
      // Predicated region
      $region9: #{tpu_custom_call.1} parent=5 // pred_check
        _
      $region10: #{tpu_custom_call.1} parent=5 // pred_check_branch
        %310 = sbr.rel (%p307) target = $region12
      $region11: #{tpu_custom_call.1} parent=5 // pred_region
        %s311 = ssub.s32 %s30, 1
        // Predicated region
        $region13: #{tpu_custom_call.1} parent=11 // pred_check
          %p312 = pneg %p77
        $region14: #{tpu_custom_call.1} parent=11 // pred_check_branch
          %314 = sbr.rel (%p312) target = $region16
        $region15: #{tpu_custom_call.1} parent=11 // pred_region
          %316 = vsyncadd [#allocation7], 0
          %s317 = sshll.u32 %s1, 4
          %s318 = int_to_ptr.hbm [resolvable:$true] %s317
          %s319 = sshll.u32 [#allocation6], 4
          %s320 = int_to_ptr.vmem [resolvable:$true] %s319
          %325 = dma.hbm_to_vmem [thread:$0]  %s318, 512, %s320, [#allocation7], 128, 128, 8
        $region16: #{tpu_custom_call.1} parent=11 // pred_fallthru
          _
        // Predicated region
        $region17: #{tpu_custom_call.1} parent=11 // pred_check
          %p326 = pneg %p98
        $region18: #{tpu_custom_call.1} parent=11 // pred_check_branch
          %328 = sbr.rel (%p326) target = $region20
        $region19: #{tpu_custom_call.1} parent=11 // pred_region
          _
        $region20: #{tpu_custom_call.1} parent=11 // pred_fallthru
          _
        // Predicated region
        $region21: #{tpu_custom_call.1} parent=11 // pred_check
          %p329 = pneg %p119
        $region22: #{tpu_custom_call.1} parent=11 // pred_check_branch
          %331 = sbr.rel (%p329) target = $region24
        $region23: #{tpu_custom_call.1} parent=11 // pred_region
          %333 = vsyncadd [#allocation7], 0
          %s334 = sshll.u32 %s3, 4
          %s335 = int_to_ptr.hbm [resolvable:$true] %s334
          %s336 = sshll.u32 [#allocation8], 4
          %s337 = int_to_ptr.vmem [resolvable:$true] %s336
          %342 = dma.hbm_to_vmem [thread:$0]  %s335, 1024, %s337, [#allocation7], 128, 128, 8
        $region24: #{tpu_custom_call.1} parent=11 // pred_fallthru
          _
        // Predicated region
        $region25: #{tpu_custom_call.1} parent=11 // pred_check
          %p343 = pneg %p140
        $region26: #{tpu_custom_call.1} parent=11 // pred_check_branch
          %345 = sbr.rel (%p343) target = $region28
        $region27: #{tpu_custom_call.1} parent=11 // pred_region
          _
        $region28: #{tpu_custom_call.1} parent=11 // pred_fallthru
          _
        // Predicated region
        $region29: #{tpu_custom_call.1} parent=11 // pred_check
          %p346 = pneg %p161
        $region30: #{tpu_custom_call.1} parent=11 // pred_check_branch
          %348 = sbr.rel (%p346) target = $region32
        $region31: #{tpu_custom_call.1} parent=11 // pred_region
          _
        $region32: #{tpu_custom_call.1} parent=11 // pred_fallthru
          _
        // Predicated region
        $region33: #{tpu_custom_call.1} parent=11 // pred_check
          %p349 = pneg %p182
        $region34: #{tpu_custom_call.1} parent=11 // pred_check_branch
          %351 = sbr.rel (%p349) target = $region36
        $region35: #{tpu_custom_call.1} parent=11 // pred_region
          _
        $region36: #{tpu_custom_call.1} parent=11 // pred_fallthru
          _
        // Predicated region
        $region37: #{tpu_custom_call.1} parent=11 // pred_check
          %p352 = pneg %p203
        $region38: #{tpu_custom_call.1} parent=11 // pred_check_branch
          %354 = sbr.rel (%p352) target = $region40
        $region39: #{tpu_custom_call.1} parent=11 // pred_region
          %356 = vsyncadd [#allocation10], 0
          %s357 = sshll.u32 %s7, 4
          %s358 = int_to_ptr.hbm [resolvable:$true] %s357
          %s359 = sshll.u32 [#allocation9], 4
          %s360 = int_to_ptr.vmem [resolvable:$true] %s359
          %365 = dma.hbm_to_vmem [thread:$0]  %s358, 512, %s360, [#allocation10], 128, 128, 8
        $region40: #{tpu_custom_call.1} parent=11 // pred_fallthru
          _
        // Predicated region
        $region41: #{tpu_custom_call.1} parent=11 // pred_check
          %p366 = pneg %p224
        $region42: #{tpu_custom_call.1} parent=11 // pred_check_branch
          %368 = sbr.rel (%p366) target = $region44
        $region43: #{tpu_custom_call.1} parent=11 // pred_region
          _
        $region44: #{tpu_custom_call.1} parent=11 // pred_fallthru
          _
        // Predicated region
        $region45: #{tpu_custom_call.1} parent=11 // pred_check
          %p369 = pneg %p245
        $region46: #{tpu_custom_call.1} parent=11 // pred_check_branch
          %371 = sbr.rel (%p369) target = $region48
        $region47: #{tpu_custom_call.1} parent=11 // pred_region
          _
        $region48: #{tpu_custom_call.1} parent=11 // pred_fallthru
          _
      $region12: #{tpu_custom_call.1} parent=5 // pred_fallthru
        _
      %p372 = scmp.lt.s32.totalorder %s30, 2
      // Predicated region
      $region49: #{tpu_custom_call.1} parent=5 // pred_check
        %p373 = pneg %p372
      $region50: #{tpu_custom_call.1} parent=5 // pred_check_branch
        %375 = sbr.rel (%p373) target = $region52
      $region51: #{tpu_custom_call.1} parent=5 // pred_region
        // Predicated region
        $region53: #{tpu_custom_call.1} parent=51 // pred_check
          %p376 = pneg %p50
        $region54: #{tpu_custom_call.1} parent=51 // pred_check_branch
          %378 = sbr.rel (%p376) target = $region56
        $region55: #{tpu_custom_call.1} parent=51 // pred_region
          %s379 = sand.u32 %s40, 1
          %s380 = scalar_lea.sflag [#allocation4], %s379
          %s381 = sand.u32 %s40, 1
          %s382 = smul.addr %s381, 8
          %s383 = scalar_lea.vmem [#allocation3], %s382
          %385 = vsyncadd %s380, 0
          %s386 = smul.addr %s30, 8
          %s387 = scalar_lea.hbm %s0, %s386
          %s389 = sshll.u32 %s387, 4
          %s390 = int_to_ptr.hbm [resolvable:$true] %s389
          %s391 = sshll.u32 %s383, 4
          %s392 = int_to_ptr.vmem [resolvable:$true] %s391
          %394 = dma.hbm_to_vmem [thread:$0]  %s390, 128, %s392, %s380
        $region56: #{tpu_custom_call.1} parent=51 // pred_fallthru
          _
      $region52: #{tpu_custom_call.1} parent=5 // pred_fallthru
        _
      %p395 = scmp.le.s32.totalorder 1, %s30
      %p396 = scmp.lt.s32.totalorder %s30, 3
      %p397 = pnand %p395, %p396
      %p398 = pneg %p397
      // Predicated region
      $region57: #{tpu_custom_call.1} parent=5 // pred_check
        _
      $region58: #{tpu_custom_call.1} parent=5 // pred_check_branch
        %400 = sbr.rel (%p397) target = $region60
      $region59: #{tpu_custom_call.1} parent=5 // pred_region
        %s401 = ssub.s32 %s30, 1
        %s402 = sand.u32 %s43, 1
        %s403 = scalar_lea.sflag [#allocation4], %s402
        %s404 = sand.u32 %s43, 1
        %s405 = smul.addr %s404, 8
        %s406 = scalar_lea.vmem [#allocation3], %s405
        // Predicated region
        $region61: #{tpu_custom_call.1} parent=59 // pred_check
          %p407 = pneg %p56
        $region62: #{tpu_custom_call.1} parent=59 // pred_check_branch
          %409 = sbr.rel (%p407) target = $region64
        $region63: #{tpu_custom_call.1} parent=59 // pred_region
          %411 = dma.done %s403, 128
        $region64: #{tpu_custom_call.1} parent=59 // pred_fallthru
          _
        // Predicated region
        $region65: #{tpu_custom_call.1} parent=59 // pred_check
          %p412 = pneg %p77
        $region66: #{tpu_custom_call.1} parent=59 // pred_check_branch
          %414 = sbr.rel (%p412) target = $region68
        $region67: #{tpu_custom_call.1} parent=59 // pred_region
          %416 = dma.done [#allocation7], 512
        $region68: #{tpu_custom_call.1} parent=59 // pred_fallthru
          _
        // Predicated region
        $region69: #{tpu_custom_call.1} parent=59 // pred_check
          %p417 = pneg %p119
        $region70: #{tpu_custom_call.1} parent=59 // pred_check_branch
          %419 = sbr.rel (%p417) target = $region72
        $region71: #{tpu_custom_call.1} parent=59 // pred_region
          %421 = dma.done [#allocation7], 1024
        $region72: #{tpu_custom_call.1} parent=59 // pred_fallthru
          _
        // Predicated region
        $region73: #{tpu_custom_call.1} parent=59 // pred_check
          %p422 = pneg %p203
        $region74: #{tpu_custom_call.1} parent=59 // pred_check_branch
          %424 = sbr.rel (%p422) target = $region76
        $region75: #{tpu_custom_call.1} parent=59 // pred_region
          %426 = dma.done [#allocation10], 512
        $region76: #{tpu_custom_call.1} parent=59 // pred_fallthru
          _
        %s427 = sand.u32 %s43, 1
        %s428 = scalar_lea.sflag [#allocation4], %s427
        %s429 = sand.u32 %s43, 1
        %s430 = smul.addr %s429, 8
        %s431 = scalar_lea.vmem [#allocation3], %s430
        %p432 = pneg %p56
        %p433 = pneg %p53
        %p434 = pneg %p77
        %p435 = pneg %p74
        %p436 = pneg %p98
        %p437 = pneg %p95
        %p438 = pneg %p119
        %p439 = pneg %p116
        %p440 = pneg %p140
        %p441 = pneg %p137
        %p442 = pneg %p161
        %p443 = pneg %p158
        %p444 = pneg %p182
        %p445 = pneg %p179
        %p446 = pneg %p203
        %p447 = pneg %p200
        %p448 = pneg %p224
        %p449 = pneg %p221
        %p450 = pneg %p245
        %p451 = pneg %p242
        %p452 = pneg %p271
        %p453 = pneg %p268
        %s454 = sand.u32 %s258, 1
        %s455 = scalar_lea.sflag [#allocation5], %s454
        %s456 = sand.u32 %s258, 1
        %s457 = smul.addr %s456, 8
        %s458 = scalar_lea.vmem [#allocation11], %s457
        %p459 = pneg %p297
        %p460 = pneg %p294
        %s461 = sand.u32 %s284, 1
        %s462 = scalar_lea.sflag [#allocation13], %s461
        %s463 = sand.u32 %s284, 1
        %s464 = smul.addr %s463, 8
        %s465 = scalar_lea.vmem [#allocation12], %s464
        %v466 = vld [vmem:[%s406] sm:$0xff]
        %v467 = vld [vmem:[#allocation6] sm:$0xff]
        %v468 = vld [vmem:[#allocation6 + $0x8] sm:$0xff]
        %v469 = vld [vmem:[#allocation6 + $0x10] sm:$0xff]
        %v470 = vld [vmem:[#allocation6 + $0x18] sm:$0xff]
        %v471 = vld [vmem:[%s2] sm:$0x1]
        %v473 = vperm.slane %v471, 0
        %vm475 = vcmask 261120
        %v477 = vsel %vm475, %v466, 0
        %479 = vmatpush.msra.mxu0 0.0
        %480 = vmatpush.msra.mxu0 0.0
        %481 = vmatpush.msra.mxu0 0.0
        %482 = vmatpush.msra.mxu0 0.0
        %483 = vmatpush.msra.mxu0 0.0
        %484 = vmatpush.msra.mxu0 0.0
        %485 = vmatpush.msra.mxu0 0.0
        %486 = vmatpush.msra.mxu0 0.0
        %487 = vmatpush.msra.mxu0 0.0
        %488 = vmatpush.msra.mxu0 0.0
        %489 = vmatpush.msra.mxu0 0.0
        %490 = vmatpush.msra.mxu0 0.0
        %491 = vmatpush.msra.mxu0 %v470
        %492 = vmatpush.msra.mxu0 %v469
        %493 = vmatpush.msra.mxu0 %v468
        %494 = vmatpush.msra.mxu0 %v467
        %495 = vmatmul.f32.gmra.mxu0 %v477
        %v496 = vpop.f32.mrf.mxu0
        %v497 = vadd.f32 %v473, %v496
        %498 = vdwg.mxu0
        %vm499 = vcmask 523264
        %v500 = vsel %vm499, %v497, -inf
        %501 = vmax.xlane.f32.xlu0 %v500
        %v502 = vpop.xlane.xlu0 %501
        %v503 = vsub.f32 %v497, %v502
        %v504 = vmul.f32 %v503, 1.442695
        %v505 = vpow.pop %v504
        %v506 = vsel %vm499, %v505, 0.0
        %507 = vadd.xlane.f32.xlu0 %v506
        %v508 = vpop.xlane.xlu0 %507
        %v509 = vrcp.pop %v508
        %v510 = vmul.f32 %v508, %v509
        %v511 = vsub.f32 1.0, %v510
        %v512 = vmul.f32 %v509, %v511
        %v513 = vadd.f32 %v509, %v512
        %vm514 = vweird.f32 %v508
        %vm515 = vweird.f32 %v509
        %vm516 = vmor %vm514, %vm515
        %v517 = vsel %vm516, %v509, %v513
        %v518 = vand.u32 2147483647, %v508
        %vm519 = vcmp.eq.f32.partialorder %v518, 8.507059e+37
        %v520 = vand.u32 %v508, 2147483648
        %v521 = vor.u32 1.1754944e-38, %v520
        %v522 = vsel %vm519, %v521, %v517
        %v523 = vmul.f32 %v505, %v522
        %524 = vst.msk [vmem:[%s465] sm:$0xff] %vm499, %v523
        %v525 = vld [vmem:[#allocation8] sm:$0xff]
        %v526 = vld [vmem:[#allocation8 + $0x8] sm:$0xff]
        %v527 = vld [vmem:[#allocation8 + $0x10] sm:$0xff]
        %v528 = vld [vmem:[#allocation8 + $0x18] sm:$0xff]
        %v529 = vld [vmem:[#allocation8 + $0x20] sm:$0xff]
        %v530 = vld [vmem:[#allocation8 + $0x28] sm:$0xff]
        %v531 = vld [vmem:[#allocation8 + $0x30] sm:$0xff]
        %v532 = vld [vmem:[#allocation8 + $0x38] sm:$0xff]
        %v533 = vld [vmem:[%s4] sm:$0x1]
        %v534 = vld [vmem:[%s5] sm:$0x1]
        %s535 = sld [smem:[#allocation2]]
        %v536 = vld [vmem:[#allocation9] sm:$0xff]
        %v537 = vld [vmem:[#allocation9 + $0x8] sm:$0xff]
        %v538 = vld [vmem:[#allocation9 + $0x10] sm:$0xff]
        %v539 = vld [vmem:[#allocation9 + $0x18] sm:$0xff]
        %v540 = vld [vmem:[%s8] sm:$0x1]
        %v541 = vld [vmem:[%s9] sm:$0x1]
        %v543 = vperm.slane %v533, 0
        %v546 = vsel %vm499, %v523, 0
        %548 = vmatpush.msra.mxu0 0.0
        %549 = vmatpush.msra.mxu0 0.0
        %550 = vmatpush.msra.mxu0 0.0
        %551 = vmatpush.msra.mxu0 0.0
        %552 = vmatpush.msra.mxu0 0.0
        %553 = vmatpush.msra.mxu0 0.0
        %554 = vmatpush.msra.mxu0 0.0
        %555 = vmatpush.msra.mxu0 0.0
        %556 = vmatpush.msra.mxu0 %v532
        %557 = vmatpush.msra.mxu0 %v531
        %558 = vmatpush.msra.mxu0 %v530
        %559 = vmatpush.msra.mxu0 %v529
        %560 = vmatpush.msra.mxu0 %v528
        %561 = vmatpush.msra.mxu0 %v527
        %562 = vmatpush.msra.mxu0 %v526
        %563 = vmatpush.msra.mxu0 %v525
        %564 = vmatmul.f32.gmra.mxu0 %v546
        %v565 = vpop.f32.mrf.mxu0
        %v566 = vadd.f32 %v543, %v565
        %567 = vdwg.mxu0
        %v568 = vmax.f32 %v566, 0.0
        %v570 = vperm.slane %v534, 0
        %v572 = vmul.f32 %v568, %v570
        %573 = vadd.xlane.f32.xlu0 %v572
        %v574 = vpop.xlane.xlu0 %573
        %v575 = vstv %s535
        %v576 = vadd.f32 %v574, %v575
        %v577 = vxor.u32 %v576, 2147483648
        %v578 = vmul.f32 %v577, 1.442695
        %v579 = vpow.pop %v578
        %v580 = vadd.f32 %v579, 1.0
        %v581 = vrcp.pop %v580
        %v582 = vmul.f32 %v580, %v581
        %v583 = vsub.f32 1.0, %v582
        %v584 = vmul.f32 %v581, %v583
        %v585 = vadd.f32 %v581, %v584
        %vm586 = vweird.f32 %v580
        %vm587 = vweird.f32 %v581
        %vm588 = vmor %vm586, %vm587
        %v589 = vsel %vm588, %v581, %v585
        %v590 = vand.u32 2147483647, %v580
        %vm591 = vcmp.eq.f32.partialorder %v590, 8.507059e+37
        %v592 = vand.u32 %v580, 2147483648
        %v593 = vor.u32 1.1754944e-38, %v592
        %v594 = vsel %vm591, %v593, %v589
        %v595 = vmul.f32 1.0, %v594
        %v597 = vperm.slane %v540, 0
        %v599 = vmul.f32 %v595, %v597
        %600 = vmatpush.msra.mxu0 0.0
        %601 = vmatpush.msra.mxu0 0.0
        %602 = vmatpush.msra.mxu0 0.0
        %603 = vmatpush.msra.mxu0 0.0
        %604 = vmatpush.msra.mxu0 0.0
        %605 = vmatpush.msra.mxu0 0.0
        %606 = vmatpush.msra.mxu0 0.0
        %607 = vmatpush.msra.mxu0 0.0
        %608 = vmatpush.msra.mxu0 0.0
        %609 = vmatpush.msra.mxu0 0.0
        %610 = vmatpush.msra.mxu0 0.0
        %611 = vmatpush.msra.mxu0 0.0
        %612 = vmatpush.msra.mxu0 %v539
        %613 = vmatpush.msra.mxu0 %v538
        %614 = vmatpush.msra.mxu0 %v537
        %615 = vmatpush.msra.mxu0 %v536
        %616 = vmatmul.f32.gmra.mxu0 %v477
        %v617 = vpop.f32.mrf.mxu0
        %v618 = vadd.f32 %v599, %v617
        %619 = vdwg.mxu0
        %v621 = vperm.slane %v541, 0
        %v623 = vadd.f32 %v618, %v621
        %624 = vst.msk [vmem:[%s458] sm:$0xff] %vm475, %v623
        %s625 = sand.u32 %s258, 1
        %s626 = scalar_lea.sflag [#allocation5], %s625
        %s627 = sand.u32 %s258, 1
        %s628 = smul.addr %s627, 8
        %s629 = scalar_lea.vmem [#allocation11], %s628
        %s630 = sand.u32 %s284, 1
        %s631 = scalar_lea.sflag [#allocation13], %s630
        %s632 = sand.u32 %s284, 1
        %s633 = smul.addr %s632, 8
        %s634 = scalar_lea.vmem [#allocation12], %s633
        // Predicated region
        $region77: #{tpu_custom_call.1} parent=59 // pred_check
          %p635 = pneg %p268
        $region78: #{tpu_custom_call.1} parent=59 // pred_check_branch
          %637 = sbr.rel (%p635) target = $region80
        $region79: #{tpu_custom_call.1} parent=59 // pred_region
          %639 = vsyncadd %s626, 0
          %s640 = smul.addr %s35, 8
          %s641 = scalar_lea.hbm %s10, %s640
          %s643 = sshll.u32 %s629, 4
          %s644 = int_to_ptr.vmem [resolvable:$true] %s643
          %s645 = sshll.u32 %s641, 4
          %s646 = int_to_ptr.hbm [resolvable:$true] %s645
          %648 = dma.vmem_to_hbm [thread:$0]  %s644, 128, %s646, %s626
        $region80: #{tpu_custom_call.1} parent=59 // pred_fallthru
          _
        // Predicated region
        $region81: #{tpu_custom_call.1} parent=59 // pred_check
          %p649 = pneg %p294
        $region82: #{tpu_custom_call.1} parent=59 // pred_check_branch
          %651 = sbr.rel (%p649) target = $region84
        $region83: #{tpu_custom_call.1} parent=59 // pred_region
          %653 = vsyncadd %s631, 0
          %s654 = smul.addr %s35, 8
          %s655 = scalar_lea.hbm %s11, %s654
          %s657 = sshll.u32 %s634, 4
          %s658 = int_to_ptr.vmem [resolvable:$true] %s657
          %s659 = sshll.u32 %s655, 4
          %s660 = int_to_ptr.hbm [resolvable:$true] %s659
          %662 = dma.vmem_to_hbm [thread:$0]  %s658, 128, %s660, %s631
        $region84: #{tpu_custom_call.1} parent=59 // pred_fallthru
          _
      $region60: #{tpu_custom_call.1} parent=5 // pred_fallthru
        _
      %p663 = scmp.le.s32.totalorder 2, %s30
      // Predicated region
      $region85: #{tpu_custom_call.1} parent=5 // pred_check
        %p664 = pneg %p663
      $region86: #{tpu_custom_call.1} parent=5 // pred_check_branch
        %666 = sbr.rel (%p664) target = $region88
      $region87: #{tpu_custom_call.1} parent=5 // pred_region
        %s667 = ssub.s32 %s30, 2
        // Predicated region
        $region89: #{tpu_custom_call.1} parent=87 // pred_check
          %p668 = pneg %p274
        $region90: #{tpu_custom_call.1} parent=87 // pred_check_branch
          %670 = sbr.rel (%p668) target = $region92
        $region91: #{tpu_custom_call.1} parent=87 // pred_region
          %s671 = sand.u32 %s259, 1
          %s672 = scalar_lea.sflag [#allocation5], %s671
          %s673 = sand.u32 %s259, 1
          %s674 = smul.addr %s673, 8
          %s675 = scalar_lea.vmem [#allocation11], %s674
          %677 = dma.done %s672, 128
        $region92: #{tpu_custom_call.1} parent=87 // pred_fallthru
          _
        // Predicated region
        $region93: #{tpu_custom_call.1} parent=87 // pred_check
          %p678 = pneg %p300
        $region94: #{tpu_custom_call.1} parent=87 // pred_check_branch
          %680 = sbr.rel (%p678) target = $region96
        $region95: #{tpu_custom_call.1} parent=87 // pred_region
          %s681 = sand.u32 %s285, 1
          %s682 = scalar_lea.sflag [#allocation13], %s681
          %s683 = sand.u32 %s285, 1
          %s684 = smul.addr %s683, 8
          %s685 = scalar_lea.vmem [#allocation12], %s684
          %687 = dma.done %s682, 128
        $region96: #{tpu_custom_call.1} parent=87 // pred_fallthru
          _
      $region88: #{tpu_custom_call.1} parent=5 // pred_fallthru
        _
    $region6: #{tpu_custom_call.1} parent=1 // loop_footer
      %s34 = sadd.s32 1, %s30
    $region7: #{tpu_custom_call.1} parent=1 // loop_footer_branch
      %29 = sbr.rel target = $region3
    $region8: #{tpu_custom_call.1} parent=1 // loop_exit
      _
    %688 = vsyncpa [#allocation4], 1
    %s689 = scalar_lea.sflag [#allocation4], 1
    %690 = vsyncpa %s689, 1
    %691 = vsyncpa [#allocation7], 1
    %692 = vsyncpa [#allocation10], 1
    %693 = vsyncpa [#allocation5], 1
    %s694 = scalar_lea.sflag [#allocation5], 1
    %695 = vsyncpa %s694, 1
    %696 = vsyncpa [#allocation13], 1
    %s697 = scalar_lea.sflag [#allocation13], 1
    %698 = vsyncpa %s697, 1

</llo_original>
